<compile_context>
chip_gen: v7x
topology: tpu7x:2x2x1
jax: 0.10.0
libtpu: 0.0.40
codegen_flags: <defaults>
</compile_context>

<pallas_src>
import functools

import jax
import jax.numpy as jnp
from jax import lax
from jax.experimental import pallas as pl
from jax.experimental.pallas import tpu as pltpu


# --------------------------------------------------------------------------- kernel
def _gumbel_sinkhorn_kernel(*refs, inv_temp, max_iter, gumbel_eps, m_valid,
                            noise_mode):
    """refs layout depends on noise_mode:
         "hw"   -> (seed_ref[SMEM scalar prefetch], s_ref, o_ref)
         "host" -> (s_ref, u_ref, o_ref)   (uniform noise passed as an input)
         "none" -> (s_ref, o_ref)
       s_ref / u_ref / o_ref are (Bt, N, Mp) VMEM tiles."""
    if noise_mode == "hw":
        seed_ref, s_ref, o_ref = refs
        u_ref = None
    elif noise_mode == "host":
        s_ref, u_ref, o_ref = refs
        seed_ref = None
    else:
        s_ref, o_ref = refs
        seed_ref = u_ref = None

    bt, n, mp = s_ref.shape
    s = s_ref[...].astype(jnp.float32)

    # ---- Gumbel noise (vectorized over the whole (Bt, N, Mp) block) ----------
    if noise_mode == "hw":
        pltpu.prng_seed(seed_ref[0] + pl.program_id(0))
        bits = pltpu.bitcast(pltpu.prng_random_bits((bt, n, mp)), jnp.uint32)
        fbits = (bits >> 9) | jnp.uint32(0x3F800000)          # mantissa trick
        u = pltpu.bitcast(fbits, jnp.float32) - 1.0           # uniform in [0, 1)
    elif noise_mode == "host":
        u = u_ref[...].astype(jnp.float32)
    else:
        u = None

    # ---- first normalization == softmax over torch dim=1 (axis 1), max-shifted
    if u is None:
        x = s * inv_temp
        m = jnp.max(x, axis=1, keepdims=True)
        p = jnp.exp(x - m)
    elif inv_temp == 1.0:
        # EUP-light path (temp == 1): g = -log(e)  =>  exp(s + g - m) = exp(s - m) / e.
        # Using the per-column shift m = max(s) instead of max(s + g) is exact
        # because the first normalization divides by the per-column sum.
        e = -jnp.log(u + gumbel_eps) + gumbel_eps
        m = jnp.max(s, axis=1, keepdims=True)
        p = jnp.exp(s - m) / e
    else:
        g = -jnp.log(-jnp.log(u + gumbel_eps) + gumbel_eps)
        x = (s + g) * inv_temp
        m = jnp.max(x, axis=1, keepdims=True)
        p = jnp.exp(x - m)

    # Padded lanes contribute exactly 0 to every sum.
    if m_valid != mp:
        lane = lax.broadcasted_iota(jnp.int32, (bt, n, mp), dimension=2)
        p = jnp.where(lane < m_valid, p, 0.0)

    csum = jnp.sum(p, axis=1, keepdims=True)
    p = p * (1.0 / jnp.maximum(csum, 1e-30))

    # ---- Exp-space Sinkhorn: s -= logsumexp(s, dim)  <=>  p /= sum(p, dim) ---
    # Reciprocal is computed on the small reduced array (cheap), then
    # broadcast-multiplied over the full tile; no full-tile exp per iteration.
    for i in range(max_iter):
        axis = 2 if (i % 2 == 0) else 1     # torch dim2 -> axis 2, dim1 -> axis 1
        ssum = jnp.sum(p, axis=axis, keepdims=True)
        p = p * (1.0 / jnp.maximum(ssum, 1e-30))

    o_ref[...] = p.astype(o_ref.dtype)


# --------------------------------------------------------------------------- planning
def _device_kind():
    try:
        d = jax.devices()[0]
        if d.platform != "tpu":
            return None
        return (getattr(d, "device_kind", "") or "").lower()
    except Exception:
        return None


def _plan_tiles(B, N, Mp, noise_mode):
    kind = _device_kind()
    two_core = kind is not None and any(t in kind for t in ("v7", "v4", "v5p"))
    if kind is None:                       # non-TPU backend (interpreter checks)
        tile_budget, vmem_cap = 2 << 20, 48 << 20
    elif "v7" in kind:                     # 64 MiB physical VMEM per TensorCore
        tile_budget, vmem_cap = 3 << 20, 48 << 20
    else:                                  # v5e / v6e (128 MiB VMEM): bigger tiles
        tile_budget, vmem_cap = 6 << 20, 96 << 20

    per = N * Mp * 4                       # f32 bytes per batch element
    bt = max(1, min(tile_budget // max(per, 1), 64, B))
    if two_core and B >= 2:
        bt = min(bt, (B + 1) // 2)         # keep >= 2 grid steps only on 2-TC chips
    b_pad = ((B + bt - 1) // bt) * bt      # pad B up rather than degrading bt

    tile_bytes = bt * per
    n_in = 2 if noise_mode == "host" else 1
    # 2x-buffered inputs + 2x-buffered output + ~4 tiles of in-kernel temporaries.
    vmem = (2 * n_in + 2 + 4) * tile_bytes + (4 << 20)
    vmem = int(min(max(vmem, 32 << 20), vmem_cap))
    return bt, b_pad, vmem


# --------------------------------------------------------------------------- wrapper
def gumbel_sinkhorn(s, seed=0, *, temp=1.0, max_iter=9, gumbel_eps=1e-20,
                    add_noise=True, use_hw_prng=None):
    """s: (B, N, M) float array. Returns (B, N, M) doubly-stochastic-ish matrices.

    Note: the Gumbel noise stream depends on the backend (hardware PRNG vs
    jax.random) and on the tiling, so it cannot bit-match the PyTorch RNG.
    """
    B, N, M = s.shape
    Mp = ((M + 127) // 128) * 128          # lane-dense last dim

    if use_hw_prng is None:
        # Hardware PRNG only lowers through Mosaic; fall back to host-generated
        # noise on any non-TPU backend (e.g. the generic Pallas interpreter).
        use_hw_prng = jax.default_backend() == "tpu"
    noise_mode = "none" if not add_noise else ("hw" if use_hw_prng else "host")

    bt, Bp, vmem_limit = _plan_tiles(B, N, Mp, noise_mode)

    s_p = s
    if (Mp != M) or (Bp != B):
        s_p = jnp.pad(s, ((0, Bp - B), (0, 0), (0, Mp - M)))

    kernel = functools.partial(
        _gumbel_sinkhorn_kernel,
        inv_temp=1.0 / float(temp),
        max_iter=int(max_iter),
        gumbel_eps=float(gumbel_eps),
        m_valid=int(M),
        noise_mode=noise_mode,
    )

    if noise_mode == "hw":
        nsp = 1
        idx = lambda b, seed_ref: (b, 0, 0)
        in_specs = [pl.BlockSpec((bt, N, Mp), idx)]
        args = (jnp.asarray([int(seed)], dtype=jnp.int32), s_p)
    elif noise_mode == "host":
        nsp = 0
        idx = lambda b: (b, 0, 0)
        in_specs = [pl.BlockSpec((bt, N, Mp), idx),
                    pl.BlockSpec((bt, N, Mp), idx)]
        u = jax.random.uniform(jax.random.PRNGKey(int(seed)), (Bp, N, Mp),
                               dtype=jnp.float32)
        args = (s_p, u)
    else:
        nsp = 0
        idx = lambda b: (b, 0, 0)
        in_specs = [pl.BlockSpec((bt, N, Mp), idx)]
        args = (s_p,)

    out = pl.pallas_call(
        kernel,
        out_shape=jax.ShapeDtypeStruct((Bp, N, Mp), s.dtype),
        grid_spec=pltpu.PrefetchScalarGridSpec(
            num_scalar_prefetch=nsp,
            grid=(Bp // bt,),
            in_specs=in_specs,
            out_specs=pl.BlockSpec((bt, N, Mp), idx),
        ),
        compiler_params=pltpu.CompilerParams(
            dimension_semantics=("parallel",),
            vmem_limit_bytes=vmem_limit,
        ),
    )(*args)

    if (Mp != M) or (Bp != B):
        out = out[:B, :, :M]
    return out


# --------------------------------------------------------------------------- reference
def _lse(x, axis):
    m = jnp.max(x, axis=axis, keepdims=True)
    return m + jnp.log(jnp.sum(jnp.exp(x - m), axis=axis, keepdims=True))


def _sinkhorn_log_reference(s, temp=1.0, max_iter=9):
    """Pure-JAX mirror of the PyTorch forward_log path (no noise)."""
    s = s / temp
    s = s - _lse(s, axis=1)
    for i in range(max_iter):
        axis = 2 if (i % 2 == 0) else 1
        s = s - _lse(s, axis=axis)
    return jnp.exp(s)


if __name__ == "__main__":
    key = jax.random.PRNGKey(0)
    B, N, M = 4, 16, 16
    s = jax.random.normal(key, (B, N, M), dtype=jnp.float32)

    # 1) Sinkhorn math check (noise disabled): must match the log-space reference.
    out_det = jax.block_until_ready(
        gumbel_sinkhorn(s, seed=0, temp=1.0, max_iter=9, add_noise=False))
    ref = _sinkhorn_log_reference(s, temp=1.0, max_iter=9)
    assert out_det.shape == (B, N, M)
    assert jnp.allclose(out_det, ref, atol=1e-4, rtol=1e-3), "mismatch vs reference"

    # 2) Full GumbelSinkhorn with noise: structural checks (the noise cannot
    #    bit-match a host-side torch RNG, so check invariants instead).
    out = jax.block_until_ready(gumbel_sinkhorn(s, seed=1234, temp=1.0, max_iter=9))
    assert out.shape == (B, N, M)
    assert bool(jnp.all(jnp.isfinite(out)))
    assert bool(jnp.all(out >= 0.0))
    # Last of the 9 iterations normalizes torch dim=2, so those sums are ~1.
    assert jnp.allclose(jnp.sum(out, axis=2), 1.0, atol=1e-4)
    # Column sums converge toward 1 after 9 alternating normalizations.
    assert bool(jnp.all(jnp.abs(jnp.sum(out, axis=1) - 1.0) < 0.5))
    # Deterministic for a fixed seed.
    out2 = jax.block_until_ready(gumbel_sinkhorn(s, seed=1234, temp=1.0, max_iter=9))
    assert jnp.array_equal(out, out2)

    print("KERNEL_OK")
</pallas_src>

<mosaic_0001>
module attributes {stable_mosaic.version = 11 : i64} {
  func.func @_gumbel_sinkhorn_kernel(%arg0: i32, %arg1: memref<4x16x128xf32, #tpu.memory_space<vmem>>, %arg2: memref<4x16x128xf32, #tpu.memory_space<vmem>>) attributes {dimension_semantics = [#tpu.dimension_semantics<parallel>], iteration_bounds = array<i64: 1>, scalar_prefetch = 0 : i64, scratch_operands = 0 : i64, tpu.core_type = #tpu.core_type<tc>, window_params = [{transform_indices = @transform_0, window_bounds = array<i64: 4, 16, 128>}, {transform_indices = @transform_1, window_bounds = array<i64: 4, 16, 128>}]} {
    %c0 = arith.constant 0 : index
    %c0_0 = arith.constant 0 : index
    %c0_1 = arith.constant 0 : index
    %0 = vector.load %arg1[%c0, %c0_0, %c0_1] : memref<4x16x128xf32, #tpu.memory_space<vmem>>, vector<4x16x128xf32>
    %cst = arith.constant 1.000000e+00 : f32
    %1 = vector.broadcast %cst : f32 to vector<4x16x128xf32>
    %2 = arith.mulf %0, %1 : vector<4x16x128xf32>
    %cst_2 = arith.constant dense<0xFF800000> : vector<4x128xf32>
    %3 = vector.multi_reduction <maximumf>, %2, %cst_2 [1] : vector<4x16x128xf32> to vector<4x128xf32>
    %4 = vector.shape_cast %3 : vector<4x128xf32> to vector<4x1x128xf32>
    %5 = vector.broadcast %4 : vector<4x1x128xf32> to vector<4x16x128xf32>
    %6 = arith.subf %2, %5 : vector<4x16x128xf32>
    %7 = math.exp %6 : vector<4x16x128xf32>
    %8 = tpu.iota {dimensions = array<i32: 2>} : vector<4x16x128xi32>
    %c16_i32 = arith.constant 16 : i32
    %9 = vector.broadcast %c16_i32 : i32 to vector<4x16x128xi32>
    %10 = arith.cmpi slt, %8, %9 : vector<4x16x128xi32>
    %cst_3 = arith.constant 0.000000e+00 : f32
    %11 = vector.broadcast %cst_3 : f32 to vector<4x16x128xf32>
    %12 = arith.select %10, %7, %11 : vector<4x16x128xi1>, vector<4x16x128xf32>
    %cst_4 = arith.constant dense<0.000000e+00> : vector<4x128xf32>
    %13 = vector.multi_reduction <add>, %12, %cst_4 [1] : vector<4x16x128xf32> to vector<4x128xf32>
    %14 = vector.shape_cast %13 : vector<4x128xf32> to vector<4x1x128xf32>
    %cst_5 = arith.constant 1.000000e-30 : f32
    %15 = vector.broadcast %cst_5 : f32 to vector<4x1x128xf32>
    %16 = arith.maximumf %14, %15 : vector<4x1x128xf32>
    %cst_6 = arith.constant 1.000000e+00 : f32
    %17 = vector.broadcast %cst_6 : f32 to vector<4x1x128xf32>
    %18 = arith.divf %17, %16 : vector<4x1x128xf32>
    %19 = vector.broadcast %18 : vector<4x1x128xf32> to vector<4x16x128xf32>
    %20 = arith.mulf %12, %19 : vector<4x16x128xf32>
    %cst_7 = arith.constant dense<0.000000e+00> : vector<4x16xf32>
    %21 = vector.multi_reduction <add>, %20, %cst_7 [2] : vector<4x16x128xf32> to vector<4x16xf32>
    %22 = vector.shape_cast %21 : vector<4x16xf32> to vector<4x16x1xf32>
    %cst_8 = arith.constant 1.000000e-30 : f32
    %23 = vector.broadcast %cst_8 : f32 to vector<4x16x1xf32>
    %24 = arith.maximumf %22, %23 : vector<4x16x1xf32>
    %cst_9 = arith.constant 1.000000e+00 : f32
    %25 = vector.broadcast %cst_9 : f32 to vector<4x16x1xf32>
    %26 = arith.divf %25, %24 : vector<4x16x1xf32>
    %27 = vector.broadcast %26 : vector<4x16x1xf32> to vector<4x16x128xf32>
    %28 = arith.mulf %20, %27 : vector<4x16x128xf32>
    %cst_10 = arith.constant dense<0.000000e+00> : vector<4x128xf32>
    %29 = vector.multi_reduction <add>, %28, %cst_10 [1] : vector<4x16x128xf32> to vector<4x128xf32>
    %30 = vector.shape_cast %29 : vector<4x128xf32> to vector<4x1x128xf32>
    %cst_11 = arith.constant 1.000000e-30 : f32
    %31 = vector.broadcast %cst_11 : f32 to vector<4x1x128xf32>
    %32 = arith.maximumf %30, %31 : vector<4x1x128xf32>
    %cst_12 = arith.constant 1.000000e+00 : f32
    %33 = vector.broadcast %cst_12 : f32 to vector<4x1x128xf32>
    %34 = arith.divf %33, %32 : vector<4x1x128xf32>
    %35 = vector.broadcast %34 : vector<4x1x128xf32> to vector<4x16x128xf32>
    %36 = arith.mulf %28, %35 : vector<4x16x128xf32>
    %cst_13 = arith.constant dense<0.000000e+00> : vector<4x16xf32>
    %37 = vector.multi_reduction <add>, %36, %cst_13 [2] : vector<4x16x128xf32> to vector<4x16xf32>
    %38 = vector.shape_cast %37 : vector<4x16xf32> to vector<4x16x1xf32>
    %cst_14 = arith.constant 1.000000e-30 : f32
    %39 = vector.broadcast %cst_14 : f32 to vector<4x16x1xf32>
    %40 = arith.maximumf %38, %39 : vector<4x16x1xf32>
    %cst_15 = arith.constant 1.000000e+00 : f32
    %41 = vector.broadcast %cst_15 : f32 to vector<4x16x1xf32>
    %42 = arith.divf %41, %40 : vector<4x16x1xf32>
    %43 = vector.broadcast %42 : vector<4x16x1xf32> to vector<4x16x128xf32>
    %44 = arith.mulf %36, %43 : vector<4x16x128xf32>
    %cst_16 = arith.constant dense<0.000000e+00> : vector<4x128xf32>
    %45 = vector.multi_reduction <add>, %44, %cst_16 [1] : vector<4x16x128xf32> to vector<4x128xf32>
    %46 = vector.shape_cast %45 : vector<4x128xf32> to vector<4x1x128xf32>
    %cst_17 = arith.constant 1.000000e-30 : f32
    %47 = vector.broadcast %cst_17 : f32 to vector<4x1x128xf32>
    %48 = arith.maximumf %46, %47 : vector<4x1x128xf32>
    %cst_18 = arith.constant 1.000000e+00 : f32
    %49 = vector.broadcast %cst_18 : f32 to vector<4x1x128xf32>
    %50 = arith.divf %49, %48 : vector<4x1x128xf32>
    %51 = vector.broadcast %50 : vector<4x1x128xf32> to vector<4x16x128xf32>
    %52 = arith.mulf %44, %51 : vector<4x16x128xf32>
    %cst_19 = arith.constant dense<0.000000e+00> : vector<4x16xf32>
    %53 = vector.multi_reduction <add>, %52, %cst_19 [2] : vector<4x16x128xf32> to vector<4x16xf32>
    %54 = vector.shape_cast %53 : vector<4x16xf32> to vector<4x16x1xf32>
    %cst_20 = arith.constant 1.000000e-30 : f32
    %55 = vector.broadcast %cst_20 : f32 to vector<4x16x1xf32>
    %56 = arith.maximumf %54, %55 : vector<4x16x1xf32>
    %cst_21 = arith.constant 1.000000e+00 : f32
    %57 = vector.broadcast %cst_21 : f32 to vector<4x16x1xf32>
    %58 = arith.divf %57, %56 : vector<4x16x1xf32>
    %59 = vector.broadcast %58 : vector<4x16x1xf32> to vector<4x16x128xf32>
    %60 = arith.mulf %52, %59 : vector<4x16x128xf32>
    %cst_22 = arith.constant dense<0.000000e+00> : vector<4x128xf32>
    %61 = vector.multi_reduction <add>, %60, %cst_22 [1] : vector<4x16x128xf32> to vector<4x128xf32>
    %62 = vector.shape_cast %61 : vector<4x128xf32> to vector<4x1x128xf32>
    %cst_23 = arith.constant 1.000000e-30 : f32
    %63 = vector.broadcast %cst_23 : f32 to vector<4x1x128xf32>
    %64 = arith.maximumf %62, %63 : vector<4x1x128xf32>
    %cst_24 = arith.constant 1.000000e+00 : f32
    %65 = vector.broadcast %cst_24 : f32 to vector<4x1x128xf32>
    %66 = arith.divf %65, %64 : vector<4x1x128xf32>
    %67 = vector.broadcast %66 : vector<4x1x128xf32> to vector<4x16x128xf32>
    %68 = arith.mulf %60, %67 : vector<4x16x128xf32>
    %cst_25 = arith.constant dense<0.000000e+00> : vector<4x16xf32>
    %69 = vector.multi_reduction <add>, %68, %cst_25 [2] : vector<4x16x128xf32> to vector<4x16xf32>
    %70 = vector.shape_cast %69 : vector<4x16xf32> to vector<4x16x1xf32>
    %cst_26 = arith.constant 1.000000e-30 : f32
    %71 = vector.broadcast %cst_26 : f32 to vector<4x16x1xf32>
    %72 = arith.maximumf %70, %71 : vector<4x16x1xf32>
    %cst_27 = arith.constant 1.000000e+00 : f32
    %73 = vector.broadcast %cst_27 : f32 to vector<4x16x1xf32>
    %74 = arith.divf %73, %72 : vector<4x16x1xf32>
    %75 = vector.broadcast %74 : vector<4x16x1xf32> to vector<4x16x128xf32>
    %76 = arith.mulf %68, %75 : vector<4x16x128xf32>
    %cst_28 = arith.constant dense<0.000000e+00> : vector<4x128xf32>
    %77 = vector.multi_reduction <add>, %76, %cst_28 [1] : vector<4x16x128xf32> to vector<4x128xf32>
    %78 = vector.shape_cast %77 : vector<4x128xf32> to vector<4x1x128xf32>
    %cst_29 = arith.constant 1.000000e-30 : f32
    %79 = vector.broadcast %cst_29 : f32 to vector<4x1x128xf32>
    %80 = arith.maximumf %78, %79 : vector<4x1x128xf32>
    %cst_30 = arith.constant 1.000000e+00 : f32
    %81 = vector.broadcast %cst_30 : f32 to vector<4x1x128xf32>
    %82 = arith.divf %81, %80 : vector<4x1x128xf32>
    %83 = vector.broadcast %82 : vector<4x1x128xf32> to vector<4x16x128xf32>
    %84 = arith.mulf %76, %83 : vector<4x16x128xf32>
    %cst_31 = arith.constant dense<0.000000e+00> : vector<4x16xf32>
    %85 = vector.multi_reduction <add>, %84, %cst_31 [2] : vector<4x16x128xf32> to vector<4x16xf32>
    %86 = vector.shape_cast %85 : vector<4x16xf32> to vector<4x16x1xf32>
    %cst_32 = arith.constant 1.000000e-30 : f32
    %87 = vector.broadcast %cst_32 : f32 to vector<4x16x1xf32>
    %88 = arith.maximumf %86, %87 : vector<4x16x1xf32>
    %cst_33 = arith.constant 1.000000e+00 : f32
    %89 = vector.broadcast %cst_33 : f32 to vector<4x16x1xf32>
    %90 = arith.divf %89, %88 : vector<4x16x1xf32>
    %91 = vector.broadcast %90 : vector<4x16x1xf32> to vector<4x16x128xf32>
    %92 = arith.mulf %84, %91 : vector<4x16x128xf32>
    %c0_34 = arith.constant 0 : index
    %c0_35 = arith.constant 0 : index
    %c0_36 = arith.constant 0 : index
    %93 = vector.load %arg2[%c0_34, %c0_35, %c0_36] : memref<4x16x128xf32, #tpu.memory_space<vmem>>, vector<4x16x128xf32>
    tpu.vector_store %arg2[%c0_34, %c0_35, %c0_36], %92 {strides = array<i32>} : memref<4x16x128xf32, #tpu.memory_space<vmem>>, vector<4x16x128xf32>,
    return
  }
  func.func @transform_0(%arg0: i32) -> (i32, i32, i32) {
    %c0_i32 = arith.constant 0 : i32
    %c0_i32_0 = arith.constant 0 : i32
    %c0_i32_1 = arith.constant 0 : i32
    return %arg0, %c0_i32, %c0_i32_0 : i32, i32, i32
  }
  func.func @transform_1(%arg0: i32) -> (i32, i32, i32) {
    %c0_i32 = arith.constant 0 : i32
    %c0_i32_0 = arith.constant 0 : i32
    %c0_i32_1 = arith.constant 0 : i32
    return %arg0, %c0_i32, %c0_i32_0 : i32, i32, i32
  }
}

</mosaic_0001>

<llo_original>
// kernel: tpu_custom_call.1
$region0: #{tpu_custom_call.1}
  #allocation0 [shape = 'u32[]', space=smem, size = 0x4, offset = 0x4, fixed_abs, tag = 'smem constant byte address 0x4 - core index']
  #allocation1 [shape = 'u32[144,128]{1,0:T(1,128)}', space=vmem, size = 0x12000, scoped, tag = 'internal scratch']
  %s0 = inlined_call_operand.hbm [shape: f32[4,16,128], index: 0, kind: input, shape index: {}]
  %s1 = inlined_call_operand.hbm [shape: f32[4,16,128], index: 1, kind: output, shape index: {}]
  %s2 = sld [smem:[#allocation0]]
  $region18: #{tpu_custom_call.1} parent=0
    _
  %s4 = ssub.s32 1, %s2
  %s5 = scalar_select 0, %s4, %s2
  $region1: #{tpu_custom_call.1} parent=0
    #allocation2 [shape = 'u8[32768]{0}', space=vmem, size = 0x8000, scoped, tag = 'input window, operand 0, single buffered']
    #allocation3 [shape = 's32[1]{0}', space=sflag, size = 0x4, scoped, tag = 'scoped memory for tpu_custom_call.1']
    #allocation4 [shape = 's32[1]{0}', space=sflag, size = 0x4, scoped, tag = 'scoped memory for tpu_custom_call.1']
    #allocation5 [shape = 'u8[32768]{0}', space=vmem, size = 0x8000, scoped, tag = 'output window, operand 0, single buffered']
    %6 = vsyncpa [#allocation3], 0
    %7 = vsyncpa [#allocation4], 0
    // Predicated region
    $region2: #{tpu_custom_call.1} parent=1 // pred_check
      _
    $region3: #{tpu_custom_call.1} parent=1 // pred_check_branch
      %9 = sbr.rel (0) target = $region5
    $region4: #{tpu_custom_call.1} parent=1 // pred_region
      %s11 = ssub.s32 1024, 1024
      %12 = vsyncadd [#allocation3], %s11
      %s13 = sshll.u32 [#allocation2], 4
      %s14 = int_to_ptr.vmem [resolvable:$true] %s13
      %19 = dma.hbm_to_vmem [thread:$0]  %s0, 1024, %s14, [#allocation3], 128, 128, 8
    $region5: #{tpu_custom_call.1} parent=1 // pred_fallthru
      _
    // Predicated region
    $region6: #{tpu_custom_call.1} parent=1 // pred_check
      _
    $region7: #{tpu_custom_call.1} parent=1 // pred_check_branch
      %21 = sbr.rel (0) target = $region9
    $region8: #{tpu_custom_call.1} parent=1 // pred_region
      %22 = dma.done [#allocation3], 1024
    $region9: #{tpu_custom_call.1} parent=1 // pred_fallthru
      _
    %v23 = vld [vmem:[#allocation2] sm:$0xff]
    %v24 = vld [vmem:[#allocation2 + $0x8] sm:$0xff]
    %v25 = vld [vmem:[#allocation2 + $0x10] sm:$0xff]
    %v26 = vld [vmem:[#allocation2 + $0x18] sm:$0xff]
    %v27 = vld [vmem:[#allocation2 + $0x20] sm:$0xff]
    %v28 = vld [vmem:[#allocation2 + $0x28] sm:$0xff]
    %v29 = vld [vmem:[#allocation2 + $0x30] sm:$0xff]
    %v30 = vld [vmem:[#allocation2 + $0x38] sm:$0xff]
    %v31 = vmax.f32 %v23, %v24
    %v32 = vrot.slane %v31, 4
    %v33 = vmax.f32 %v31, %v32
    %v34 = vrot.slane %v33, 2
    %v35 = vmax.f32 %v33, %v34
    %v36 = vrot.slane %v35, 1
    %v37 = vmax.f32 %v35, %v36
    %v38 = vmax.f32 %v25, %v26
    %v39 = vrot.slane %v38, 4
    %v40 = vmax.f32 %v38, %v39
    %v41 = vrot.slane %v40, 2
    %v42 = vmax.f32 %v40, %v41
    %v43 = vrot.slane %v42, 1
    %v44 = vmax.f32 %v42, %v43
    %v45 = vmax.f32 %v27, %v28
    %v46 = vrot.slane %v45, 4
    %v47 = vmax.f32 %v45, %v46
    %v48 = vrot.slane %v47, 2
    %v49 = vmax.f32 %v47, %v48
    %v50 = vrot.slane %v49, 1
    %v51 = vmax.f32 %v49, %v50
    %v52 = vmax.f32 %v29, %v30
    %v53 = vrot.slane %v52, 4
    %v54 = vmax.f32 %v52, %v53
    %v55 = vrot.slane %v54, 2
    %v56 = vmax.f32 %v54, %v55
    %v57 = vrot.slane %v56, 1
    %v58 = vmax.f32 %v56, %v57
    %v59 = vsub.f32 %v23, %v37
    %v60 = vsub.f32 %v24, %v37
    %v61 = vsub.f32 %v25, %v44
    %v62 = vsub.f32 %v26, %v44
    %v63 = vsub.f32 %v27, %v51
    %v64 = vsub.f32 %v28, %v51
    %v65 = vsub.f32 %v29, %v58
    %v66 = vsub.f32 %v30, %v58
    %v67 = vmul.f32 %v59, 1.442695
    %v68 = vpow.pop %v67
    %v69 = vmul.f32 %v60, 1.442695
    %v70 = vpow.pop %v69
    %v71 = vmul.f32 %v61, 1.442695
    %v72 = vpow.pop %v71
    %v73 = vmul.f32 %v62, 1.442695
    %v74 = vpow.pop %v73
    %v75 = vmul.f32 %v63, 1.442695
    %v76 = vpow.pop %v75
    %v77 = vmul.f32 %v64, 1.442695
    %v78 = vpow.pop %v77
    %v79 = vmul.f32 %v65, 1.442695
    %v80 = vpow.pop %v79
    %v81 = vmul.f32 %v66, 1.442695
    %v82 = vpow.pop %v81
    %v83 = vlaneseq
    %v84 = vand.u32 %v83, 127
    %vm85 = vcmp.lt.s32.totalorder %v84, 16
    %v86 = vsel %vm85, %v68, 0.0
    %v87 = vsel %vm85, %v70, 0.0
    %v88 = vsel %vm85, %v72, 0.0
    %v89 = vsel %vm85, %v74, 0.0
    %v90 = vsel %vm85, %v76, 0.0
    %v91 = vsel %vm85, %v78, 0.0
    %v92 = vsel %vm85, %v80, 0.0
    %v93 = vsel %vm85, %v82, 0.0
    %v94 = vadd.f32 %v86, %v87
    %v95 = vrot.slane %v94, 4
    %v96 = vadd.f32 %v94, %v95
    %v97 = vrot.slane %v96, 2
    %v98 = vadd.f32 %v96, %v97
    %v99 = vrot.slane %v98, 1
    %v100 = vadd.f32 %v98, %v99
    %v101 = vadd.f32 %v88, %v89
    %v102 = vrot.slane %v101, 4
    %v103 = vadd.f32 %v101, %v102
    %v104 = vrot.slane %v103, 2
    %v105 = vadd.f32 %v103, %v104
    %v106 = vrot.slane %v105, 1
    %v107 = vadd.f32 %v105, %v106
    %v108 = vadd.f32 %v90, %v91
    %v109 = vrot.slane %v108, 4
    %v110 = vadd.f32 %v108, %v109
    %v111 = vrot.slane %v110, 2
    %v112 = vadd.f32 %v110, %v111
    %v113 = vrot.slane %v112, 1
    %v114 = vadd.f32 %v112, %v113
    %v115 = vadd.f32 %v92, %v93
    %v116 = vrot.slane %v115, 4
    %v117 = vadd.f32 %v115, %v116
    %v118 = vrot.slane %v117, 2
    %v119 = vadd.f32 %v117, %v118
    %v120 = vrot.slane %v119, 1
    %v121 = vadd.f32 %v119, %v120
    %v122 = vmax.f32 %v100, 1e-30
    %v123 = vmax.f32 %v107, 1e-30
    %v124 = vmax.f32 %v114, 1e-30
    %v125 = vmax.f32 %v121, 1e-30
    %v126 = vrcp.pop %v122
    %v127 = vmul.f32 1.0, %v126
    %v128 = vrcp.pop %v123
    %v129 = vmul.f32 1.0, %v128
    %v130 = vrcp.pop %v124
    %v131 = vmul.f32 1.0, %v130
    %v132 = vrcp.pop %v125
    %v133 = vmul.f32 1.0, %v132
    %v134 = vmul.f32 %v86, %v127
    %v135 = vmul.f32 %v87, %v127
    %v136 = vmul.f32 %v88, %v129
    %v137 = vmul.f32 %v89, %v129
    %v138 = vmul.f32 %v90, %v131
    %v139 = vmul.f32 %v91, %v131
    %v140 = vmul.f32 %v92, %v133
    %v141 = vmul.f32 %v93, %v133
    %142 = vadd.xlane.f32.xlu0 %v134
    %v143 = vpop.xlane.xlu0 %142
    %144 = vadd.xlane.f32.xlu0 %v135
    %v145 = vpop.xlane.xlu0 %144
    %146 = vadd.xlane.f32.xlu0 %v136
    %v147 = vpop.xlane.xlu0 %146
    %148 = vadd.xlane.f32.xlu0 %v137
    %v149 = vpop.xlane.xlu0 %148
    %150 = vadd.xlane.f32.xlu0 %v138
    %v151 = vpop.xlane.xlu0 %150
    %152 = vadd.xlane.f32.xlu0 %v139
    %v153 = vpop.xlane.xlu0 %152
    %154 = vadd.xlane.f32.xlu0 %v140
    %v155 = vpop.xlane.xlu0 %154
    %156 = vadd.xlane.f32.xlu0 %v141
    %v157 = vpop.xlane.xlu0 %156
    %v158 = vmax.f32 %v143, 1e-30
    %v159 = vmax.f32 %v145, 1e-30
    %v160 = vmax.f32 %v147, 1e-30
    %v161 = vmax.f32 %v149, 1e-30
    %v162 = vmax.f32 %v151, 1e-30
    %v163 = vmax.f32 %v153, 1e-30
    %v164 = vmax.f32 %v155, 1e-30
    %v165 = vmax.f32 %v157, 1e-30
    %v166 = vrcp.pop %v158
    %v167 = vmul.f32 1.0, %v166
    %v168 = vrcp.pop %v159
    %v169 = vmul.f32 1.0, %v168
    %v170 = vrcp.pop %v160
    %v171 = vmul.f32 1.0, %v170
    %v172 = vrcp.pop %v161
    %v173 = vmul.f32 1.0, %v172
    %v174 = vrcp.pop %v162
    %v175 = vmul.f32 1.0, %v174
    %v176 = vrcp.pop %v163
    %v177 = vmul.f32 1.0, %v176
    %v178 = vrcp.pop %v164
    %v179 = vmul.f32 1.0, %v178
    %v180 = vrcp.pop %v165
    %v181 = vmul.f32 1.0, %v180
    %v182 = vmul.f32 %v134, %v167
    %v183 = vmul.f32 %v135, %v169
    %v184 = vmul.f32 %v136, %v171
    %v185 = vmul.f32 %v137, %v173
    %v186 = vmul.f32 %v138, %v175
    %v187 = vmul.f32 %v139, %v177
    %v188 = vmul.f32 %v140, %v179
    %v189 = vmul.f32 %v141, %v181
    %v190 = vadd.f32 %v182, %v183
    %v191 = vrot.slane %v190, 4
    %v192 = vadd.f32 %v190, %v191
    %v193 = vrot.slane %v192, 2
    %v194 = vadd.f32 %v192, %v193
    %v195 = vrot.slane %v194, 1
    %v196 = vadd.f32 %v194, %v195
    %v197 = vadd.f32 %v184, %v185
    %v198 = vrot.slane %v197, 4
    %v199 = vadd.f32 %v197, %v198
    %v200 = vrot.slane %v199, 2
    %v201 = vadd.f32 %v199, %v200
    %v202 = vrot.slane %v201, 1
    %v203 = vadd.f32 %v201, %v202
    %v204 = vadd.f32 %v186, %v187
    %v205 = vrot.slane %v204, 4
    %v206 = vadd.f32 %v204, %v205
    %v207 = vrot.slane %v206, 2
    %v208 = vadd.f32 %v206, %v207
    %v209 = vrot.slane %v208, 1
    %v210 = vadd.f32 %v208, %v209
    %v211 = vadd.f32 %v188, %v189
    %v212 = vrot.slane %v211, 4
    %v213 = vadd.f32 %v211, %v212
    %v214 = vrot.slane %v213, 2
    %v215 = vadd.f32 %v213, %v214
    %v216 = vrot.slane %v215, 1
    %v217 = vadd.f32 %v215, %v216
    %v218 = vmax.f32 %v196, 1e-30
    %v219 = vmax.f32 %v203, 1e-30
    %v220 = vmax.f32 %v210, 1e-30
    %v221 = vmax.f32 %v217, 1e-30
    %v222 = vrcp.pop %v218
    %v223 = vmul.f32 1.0, %v222
    %v224 = vrcp.pop %v219
    %v225 = vmul.f32 1.0, %v224
    %v226 = vrcp.pop %v220
    %v227 = vmul.f32 1.0, %v226
    %v228 = vrcp.pop %v221
    %v229 = vmul.f32 1.0, %v228
    %v230 = vmul.f32 %v182, %v223
    %v231 = vmul.f32 %v183, %v223
    %v232 = vmul.f32 %v184, %v225
    %v233 = vmul.f32 %v185, %v225
    %v234 = vmul.f32 %v186, %v227
    %v235 = vmul.f32 %v187, %v227
    %v236 = vmul.f32 %v188, %v229
    %v237 = vmul.f32 %v189, %v229
    %238 = vadd.xlane.f32.xlu0 %v230
    %v239 = vpop.xlane.xlu0 %238
    %240 = vadd.xlane.f32.xlu0 %v231
    %v241 = vpop.xlane.xlu0 %240
    %242 = vadd.xlane.f32.xlu0 %v232
    %v243 = vpop.xlane.xlu0 %242
    %244 = vadd.xlane.f32.xlu0 %v233
    %v245 = vpop.xlane.xlu0 %244
    %246 = vadd.xlane.f32.xlu0 %v234
    %v247 = vpop.xlane.xlu0 %246
    %248 = vadd.xlane.f32.xlu0 %v235
    %v249 = vpop.xlane.xlu0 %248
    %250 = vadd.xlane.f32.xlu0 %v236
    %v251 = vpop.xlane.xlu0 %250
    %252 = vadd.xlane.f32.xlu0 %v237
    %v253 = vpop.xlane.xlu0 %252
    %v254 = vmax.f32 %v239, 1e-30
    %v255 = vmax.f32 %v241, 1e-30
    %v256 = vmax.f32 %v243, 1e-30
    %v257 = vmax.f32 %v245, 1e-30
    %v258 = vmax.f32 %v247, 1e-30
    %v259 = vmax.f32 %v249, 1e-30
    %v260 = vmax.f32 %v251, 1e-30
    %v261 = vmax.f32 %v253, 1e-30
    %v262 = vrcp.pop %v254
    %v263 = vmul.f32 1.0, %v262
    %v264 = vrcp.pop %v255
    %v265 = vmul.f32 1.0, %v264
    %v266 = vrcp.pop %v256
    %v267 = vmul.f32 1.0, %v266
    %v268 = vrcp.pop %v257
    %v269 = vmul.f32 1.0, %v268
    %v270 = vrcp.pop %v258
    %v271 = vmul.f32 1.0, %v270
    %v272 = vrcp.pop %v259
    %v273 = vmul.f32 1.0, %v272
    %v274 = vrcp.pop %v260
    %v275 = vmul.f32 1.0, %v274
    %v276 = vrcp.pop %v261
    %v277 = vmul.f32 1.0, %v276
    %v278 = vmul.f32 %v230, %v263
    %v279 = vmul.f32 %v231, %v265
    %v280 = vmul.f32 %v232, %v267
    %v281 = vmul.f32 %v233, %v269
    %v282 = vmul.f32 %v234, %v271
    %v283 = vmul.f32 %v235, %v273
    %v284 = vmul.f32 %v236, %v275
    %v285 = vmul.f32 %v237, %v277
    %v286 = vadd.f32 %v278, %v279
    %v287 = vrot.slane %v286, 4
    %v288 = vadd.f32 %v286, %v287
    %v289 = vrot.slane %v288, 2
    %v290 = vadd.f32 %v288, %v289
    %v291 = vrot.slane %v290, 1
    %v292 = vadd.f32 %v290, %v291
    %v293 = vadd.f32 %v280, %v281
    %v294 = vrot.slane %v293, 4
    %v295 = vadd.f32 %v293, %v294
    %v296 = vrot.slane %v295, 2
    %v297 = vadd.f32 %v295, %v296
    %v298 = vrot.slane %v297, 1
    %v299 = vadd.f32 %v297, %v298
    %v300 = vadd.f32 %v282, %v283
    %v301 = vrot.slane %v300, 4
    %v302 = vadd.f32 %v300, %v301
    %v303 = vrot.slane %v302, 2
    %v304 = vadd.f32 %v302, %v303
    %v305 = vrot.slane %v304, 1
    %v306 = vadd.f32 %v304, %v305
    %v307 = vadd.f32 %v284, %v285
    %v308 = vrot.slane %v307, 4
    %v309 = vadd.f32 %v307, %v308
    %v310 = vrot.slane %v309, 2
    %v311 = vadd.f32 %v309, %v310
    %v312 = vrot.slane %v311, 1
    %v313 = vadd.f32 %v311, %v312
    %v314 = vmax.f32 %v292, 1e-30
    %v315 = vmax.f32 %v299, 1e-30
    %v316 = vmax.f32 %v306, 1e-30
    %v317 = vmax.f32 %v313, 1e-30
    %v318 = vrcp.pop %v314
    %v319 = vmul.f32 1.0, %v318
    %v320 = vrcp.pop %v315
    %v321 = vmul.f32 1.0, %v320
    %v322 = vrcp.pop %v316
    %v323 = vmul.f32 1.0, %v322
    %v324 = vrcp.pop %v317
    %v325 = vmul.f32 1.0, %v324
    %v326 = vmul.f32 %v278, %v319
    %v327 = vmul.f32 %v279, %v319
    %v328 = vmul.f32 %v280, %v321
    %v329 = vmul.f32 %v281, %v321
    %v330 = vmul.f32 %v282, %v323
    %v331 = vmul.f32 %v283, %v323
    %v332 = vmul.f32 %v284, %v325
    %v333 = vmul.f32 %v285, %v325
    %334 = vadd.xlane.f32.xlu0 %v326
    %v335 = vpop.xlane.xlu0 %334
    %336 = vadd.xlane.f32.xlu0 %v327
    %v337 = vpop.xlane.xlu0 %336
    %338 = vadd.xlane.f32.xlu0 %v328
    %v339 = vpop.xlane.xlu0 %338
    %340 = vadd.xlane.f32.xlu0 %v329
    %v341 = vpop.xlane.xlu0 %340
    %342 = vadd.xlane.f32.xlu0 %v330
    %v343 = vpop.xlane.xlu0 %342
    %344 = vadd.xlane.f32.xlu0 %v331
    %v345 = vpop.xlane.xlu0 %344
    %346 = vadd.xlane.f32.xlu0 %v332
    %v347 = vpop.xlane.xlu0 %346
    %348 = vadd.xlane.f32.xlu0 %v333
    %v349 = vpop.xlane.xlu0 %348
    %v350 = vmax.f32 %v335, 1e-30
    %v351 = vmax.f32 %v337, 1e-30
    %v352 = vmax.f32 %v339, 1e-30
    %v353 = vmax.f32 %v341, 1e-30
    %v354 = vmax.f32 %v343, 1e-30
    %v355 = vmax.f32 %v345, 1e-30
    %v356 = vmax.f32 %v347, 1e-30
    %v357 = vmax.f32 %v349, 1e-30
    %v358 = vrcp.pop %v350
    %v359 = vmul.f32 1.0, %v358
    %v360 = vrcp.pop %v351
    %v361 = vmul.f32 1.0, %v360
    %v362 = vrcp.pop %v352
    %v363 = vmul.f32 1.0, %v362
    %v364 = vrcp.pop %v353
    %v365 = vmul.f32 1.0, %v364
    %v366 = vrcp.pop %v354
    %v367 = vmul.f32 1.0, %v366
    %v368 = vrcp.pop %v355
    %v369 = vmul.f32 1.0, %v368
    %v370 = vrcp.pop %v356
    %v371 = vmul.f32 1.0, %v370
    %v372 = vrcp.pop %v357
    %v373 = vmul.f32 1.0, %v372
    %v374 = vmul.f32 %v326, %v359
    %v375 = vmul.f32 %v327, %v361
    %v376 = vmul.f32 %v328, %v363
    %v377 = vmul.f32 %v329, %v365
    %v378 = vmul.f32 %v330, %v367
    %v379 = vmul.f32 %v331, %v369
    %v380 = vmul.f32 %v332, %v371
    %v381 = vmul.f32 %v333, %v373
    %v382 = vadd.f32 %v374, %v375
    %v383 = vrot.slane %v382, 4
    %v384 = vadd.f32 %v382, %v383
    %v385 = vrot.slane %v384, 2
    %v386 = vadd.f32 %v384, %v385
    %v387 = vrot.slane %v386, 1
    %v388 = vadd.f32 %v386, %v387
    %v389 = vadd.f32 %v376, %v377
    %v390 = vrot.slane %v389, 4
    %v391 = vadd.f32 %v389, %v390
    %v392 = vrot.slane %v391, 2
    %v393 = vadd.f32 %v391, %v392
    %v394 = vrot.slane %v393, 1
    %v395 = vadd.f32 %v393, %v394
    %v396 = vadd.f32 %v378, %v379
    %v397 = vrot.slane %v396, 4
    %v398 = vadd.f32 %v396, %v397
    %v399 = vrot.slane %v398, 2
    %v400 = vadd.f32 %v398, %v399
    %v401 = vrot.slane %v400, 1
    %v402 = vadd.f32 %v400, %v401
    %v403 = vadd.f32 %v380, %v381
    %v404 = vrot.slane %v403, 4
    %v405 = vadd.f32 %v403, %v404
    %v406 = vrot.slane %v405, 2
    %v407 = vadd.f32 %v405, %v406
    %v408 = vrot.slane %v407, 1
    %v409 = vadd.f32 %v407, %v408
    %v410 = vmax.f32 %v388, 1e-30
    %v411 = vmax.f32 %v395, 1e-30
    %v412 = vmax.f32 %v402, 1e-30
    %v413 = vmax.f32 %v409, 1e-30
    %v414 = vrcp.pop %v410
    %v415 = vmul.f32 1.0, %v414
    %v416 = vrcp.pop %v411
    %v417 = vmul.f32 1.0, %v416
    %v418 = vrcp.pop %v412
    %v419 = vmul.f32 1.0, %v418
    %v420 = vrcp.pop %v413
    %v421 = vmul.f32 1.0, %v420
    %v422 = vmul.f32 %v374, %v415
    %v423 = vmul.f32 %v375, %v415
    %v424 = vmul.f32 %v376, %v417
    %v425 = vmul.f32 %v377, %v417
    %v426 = vmul.f32 %v378, %v419
    %v427 = vmul.f32 %v379, %v419
    %v428 = vmul.f32 %v380, %v421
    %v429 = vmul.f32 %v381, %v421
    %430 = vadd.xlane.f32.xlu0 %v422
    %v431 = vpop.xlane.xlu0 %430
    %432 = vadd.xlane.f32.xlu0 %v423
    %v433 = vpop.xlane.xlu0 %432
    %434 = vadd.xlane.f32.xlu0 %v424
    %v435 = vpop.xlane.xlu0 %434
    %436 = vadd.xlane.f32.xlu0 %v425
    %v437 = vpop.xlane.xlu0 %436
    %438 = vadd.xlane.f32.xlu0 %v426
    %v439 = vpop.xlane.xlu0 %438
    %440 = vadd.xlane.f32.xlu0 %v427
    %v441 = vpop.xlane.xlu0 %440
    %442 = vadd.xlane.f32.xlu0 %v428
    %v443 = vpop.xlane.xlu0 %442
    %444 = vadd.xlane.f32.xlu0 %v429
    %v445 = vpop.xlane.xlu0 %444
    %v446 = vmax.f32 %v431, 1e-30
    %v447 = vmax.f32 %v433, 1e-30
    %v448 = vmax.f32 %v435, 1e-30
    %v449 = vmax.f32 %v437, 1e-30
    %v450 = vmax.f32 %v439, 1e-30
    %v451 = vmax.f32 %v441, 1e-30
    %v452 = vmax.f32 %v443, 1e-30
    %v453 = vmax.f32 %v445, 1e-30
    %v454 = vrcp.pop %v446
    %v455 = vmul.f32 1.0, %v454
    %v456 = vrcp.pop %v447
    %v457 = vmul.f32 1.0, %v456
    %v458 = vrcp.pop %v448
    %v459 = vmul.f32 1.0, %v458
    %v460 = vrcp.pop %v449
    %v461 = vmul.f32 1.0, %v460
    %v462 = vrcp.pop %v450
    %v463 = vmul.f32 1.0, %v462
    %v464 = vrcp.pop %v451
    %v465 = vmul.f32 1.0, %v464
    %v466 = vrcp.pop %v452
    %v467 = vmul.f32 1.0, %v466
    %v468 = vrcp.pop %v453
    %v469 = vmul.f32 1.0, %v468
    %v470 = vmul.f32 %v422, %v455
    %v471 = vmul.f32 %v423, %v457
    %v472 = vmul.f32 %v424, %v459
    %v473 = vmul.f32 %v425, %v461
    %v474 = vmul.f32 %v426, %v463
    %v475 = vmul.f32 %v427, %v465
    %v476 = vmul.f32 %v428, %v467
    %v477 = vmul.f32 %v429, %v469
    %v478 = vadd.f32 %v470, %v471
    %v479 = vrot.slane %v478, 4
    %v480 = vadd.f32 %v478, %v479
    %v481 = vrot.slane %v480, 2
    %v482 = vadd.f32 %v480, %v481
    %v483 = vrot.slane %v482, 1
    %v484 = vadd.f32 %v482, %v483
    %v485 = vadd.f32 %v472, %v473
    %v486 = vrot.slane %v485, 4
    %v487 = vadd.f32 %v485, %v486
    %v488 = vrot.slane %v487, 2
    %v489 = vadd.f32 %v487, %v488
    %v490 = vrot.slane %v489, 1
    %v491 = vadd.f32 %v489, %v490
    %v492 = vadd.f32 %v474, %v475
    %v493 = vrot.slane %v492, 4
    %v494 = vadd.f32 %v492, %v493
    %v495 = vrot.slane %v494, 2
    %v496 = vadd.f32 %v494, %v495
    %v497 = vrot.slane %v496, 1
    %v498 = vadd.f32 %v496, %v497
    %v499 = vadd.f32 %v476, %v477
    %v500 = vrot.slane %v499, 4
    %v501 = vadd.f32 %v499, %v500
    %v502 = vrot.slane %v501, 2
    %v503 = vadd.f32 %v501, %v502
    %v504 = vrot.slane %v503, 1
    %v505 = vadd.f32 %v503, %v504
    %v506 = vmax.f32 %v484, 1e-30
    %v507 = vmax.f32 %v491, 1e-30
    %v508 = vmax.f32 %v498, 1e-30
    %v509 = vmax.f32 %v505, 1e-30
    %v510 = vrcp.pop %v506
    %v511 = vmul.f32 1.0, %v510
    %v512 = vrcp.pop %v507
    %v513 = vmul.f32 1.0, %v512
    %v514 = vrcp.pop %v508
    %v515 = vmul.f32 1.0, %v514
    %v516 = vrcp.pop %v509
    %v517 = vmul.f32 1.0, %v516
    %v518 = vmul.f32 %v470, %v511
    %v519 = vmul.f32 %v471, %v511
    %v520 = vmul.f32 %v472, %v513
    %v521 = vmul.f32 %v473, %v513
    %v522 = vmul.f32 %v474, %v515
    %v523 = vmul.f32 %v475, %v515
    %v524 = vmul.f32 %v476, %v517
    %v525 = vmul.f32 %v477, %v517
    %526 = vadd.xlane.f32.xlu0 %v518
    %v527 = vpop.xlane.xlu0 %526
    %528 = vadd.xlane.f32.xlu0 %v519
    %v529 = vpop.xlane.xlu0 %528
    %530 = vadd.xlane.f32.xlu0 %v520
    %v531 = vpop.xlane.xlu0 %530
    %532 = vadd.xlane.f32.xlu0 %v521
    %v533 = vpop.xlane.xlu0 %532
    %534 = vadd.xlane.f32.xlu0 %v522
    %v535 = vpop.xlane.xlu0 %534
    %536 = vadd.xlane.f32.xlu0 %v523
    %v537 = vpop.xlane.xlu0 %536
    %538 = vadd.xlane.f32.xlu0 %v524
    %v539 = vpop.xlane.xlu0 %538
    %540 = vadd.xlane.f32.xlu0 %v525
    %v541 = vpop.xlane.xlu0 %540
    %v542 = vmax.f32 %v527, 1e-30
    %v543 = vmax.f32 %v529, 1e-30
    %v544 = vmax.f32 %v531, 1e-30
    %v545 = vmax.f32 %v533, 1e-30
    %v546 = vmax.f32 %v535, 1e-30
    %v547 = vmax.f32 %v537, 1e-30
    %v548 = vmax.f32 %v539, 1e-30
    %v549 = vmax.f32 %v541, 1e-30
    %v550 = vrcp.pop %v542
    %v551 = vmul.f32 1.0, %v550
    %v552 = vrcp.pop %v543
    %v553 = vmul.f32 1.0, %v552
    %v554 = vrcp.pop %v544
    %v555 = vmul.f32 1.0, %v554
    %v556 = vrcp.pop %v545
    %v557 = vmul.f32 1.0, %v556
    %v558 = vrcp.pop %v546
    %v559 = vmul.f32 1.0, %v558
    %v560 = vrcp.pop %v547
    %v561 = vmul.f32 1.0, %v560
    %v562 = vrcp.pop %v548
    %v563 = vmul.f32 1.0, %v562
    %v564 = vrcp.pop %v549
    %v565 = vmul.f32 1.0, %v564
    %v566 = vmul.f32 %v518, %v551
    %v567 = vmul.f32 %v519, %v553
    %v568 = vmul.f32 %v520, %v555
    %v569 = vmul.f32 %v521, %v557
    %v570 = vmul.f32 %v522, %v559
    %v571 = vmul.f32 %v523, %v561
    %v572 = vmul.f32 %v524, %v563
    %v573 = vmul.f32 %v525, %v565
    %574 = vst [vmem:[#allocation5] sm:$0xff] %v566
    %575 = vst [vmem:[#allocation5 + $0x8] sm:$0xff] %v567
    %576 = vst [vmem:[#allocation5 + $0x10] sm:$0xff] %v568
    %577 = vst [vmem:[#allocation5 + $0x18] sm:$0xff] %v569
    %578 = vst [vmem:[#allocation5 + $0x20] sm:$0xff] %v570
    %579 = vst [vmem:[#allocation5 + $0x28] sm:$0xff] %v571
    %580 = vst [vmem:[#allocation5 + $0x30] sm:$0xff] %v572
    %581 = vst [vmem:[#allocation5 + $0x38] sm:$0xff] %v573
    // Predicated region
    $region10: #{tpu_custom_call.1} parent=1 // pred_check
      _
    $region11: #{tpu_custom_call.1} parent=1 // pred_check_branch
      %583 = sbr.rel (0) target = $region13
    $region12: #{tpu_custom_call.1} parent=1 // pred_region
      %s585 = ssub.s32 1024, 1024
      %586 = vsyncadd [#allocation4], %s585
      %s587 = sshll.u32 [#allocation5], 4
      %s588 = int_to_ptr.vmem [resolvable:$true] %s587
      %593 = dma.vmem_to_hbm [thread:$0]  %s588, 1024, %s1, [#allocation4], 128, 128, 8
    $region13: #{tpu_custom_call.1} parent=1 // pred_fallthru
      _
    // Predicated region
    $region14: #{tpu_custom_call.1} parent=1 // pred_check
      _
    $region15: #{tpu_custom_call.1} parent=1 // pred_check_branch
      %595 = sbr.rel (0) target = $region17
    $region16: #{tpu_custom_call.1} parent=1 // pred_region
      %596 = dma.done [#allocation4], 1024
    $region17: #{tpu_custom_call.1} parent=1 // pred_fallthru
      _
    %597 = vsyncpa [#allocation3], 1
    %598 = vsyncpa [#allocation4], 1

</llo_original>
